<compile_context>
chip_gen: v7x
topology: tpu7x:2x2x1
jax: 0.10.0
libtpu: 0.0.40
codegen_flags: <defaults>
</compile_context>

<pallas_src>
import functools
import math

import jax
import jax.numpy as jnp
from jax.experimental import pallas as pl
from jax.experimental.pallas import tpu as pltpu

_LANES = 128
_LOG2 = math.log(2.0)


def _logcosh_kernel(yt_ref, yp_ref, o_ref, *, tiles_per_part, total_tiles,
                    tile_rows, last_tile_valid, need_mask, overrun):
    p = pl.program_id(0)            # partition (parallel axis)
    i = pl.program_id(1)            # row-tile within partition (reduction axis)
    g = p * tiles_per_part + i      # global tile index

    @pl.when(i == 0)
    def _():
        o_ref[...] = jnp.zeros_like(o_ref)

    def accumulate(masked):
        yt = yt_ref[...].astype(jnp.float32)
        yp = yp_ref[...].astype(jnp.float32)
        a = jnp.abs(yt - yp + jnp.float32(1e-12))
        # stable log(cosh(x)) = |x| + log1p(exp(-2|x|)) - log(2)
        lc = a + jnp.log1p(jnp.exp(-2.0 * a)) - jnp.float32(_LOG2)
        if masked:
            # Exact tail mask with tile-local indices (fits int32 for any n).
            row = jax.lax.broadcasted_iota(jnp.int32, lc.shape, 0)
            col = jax.lax.broadcasted_iota(jnp.int32, lc.shape, 1)
            lc = jnp.where(row * _LANES + col < last_tile_valid, lc, 0.0)
        # Fold sublane groups with full-vreg VALU adds into the resident
        # (8, 128) accumulator block (the output, revisited across axis 1).
        o_ref[...] += lc.reshape(tile_rows // 8, 8, _LANES).sum(axis=0)

    if need_mask:
        @pl.when(g < total_tiles - 1)
        def _():
            accumulate(False)

        @pl.when(g == total_tiles - 1)
        def _():
            accumulate(True)
    elif overrun:
        @pl.when(g < total_tiles)
        def _():
            accumulate(False)
    else:
        accumulate(False)


def logcosh_loss(y_t, y_prime_t, *, max_tile_rows=1024, num_partitions=2):
    """mean(log(cosh(y_t - y_prime_t + 1e-12))) via one Pallas TPU kernel."""
    assert y_t.shape == y_prime_t.shape, "inputs must have the same shape"
    n = int(y_t.size)
    assert n > 0, "inputs must be non-empty"

    # Keep narrow native dtypes in HBM; cast to f32 inside the kernel.
    dtype = jnp.result_type(y_t.dtype, y_prime_t.dtype)
    if (not jnp.issubdtype(dtype, jnp.floating)) or jnp.dtype(dtype).itemsize > 4:
        dtype = jnp.float32
    itemsize = jnp.dtype(dtype).itemsize
    sublane_mult = 8 * max(1, 4 // itemsize)   # 8 f32 / 16 bf16 / 32 int8-fp8

    yt = y_t.reshape(-1)
    yp = y_prime_t.reshape(-1)
    if yt.dtype != dtype:
        yt = yt.astype(dtype)
    if yp.dtype != dtype:
        yp = yp.astype(dtype)

    # Lane-dense (rows, 128) layout; rows padded only to the sublane multiple
    # so no jnp.pad HBM pre-pass is emitted when n is already aligned.
    rows = pl.cdiv(n, _LANES)
    rows_padded = pl.cdiv(rows, sublane_mult) * sublane_mult
    pad = rows_padded * _LANES - n
    if pad:
        yt = jnp.pad(yt, (0, pad))
        yp = jnp.pad(yp, (0, pad))
    yt = yt.reshape(rows_padded, _LANES)
    yp = yp.reshape(rows_padded, _LANES)

    tile_rows = min(max_tile_rows, rows_padded)
    tile_rows = pl.cdiv(tile_rows, sublane_mult) * sublane_mult
    total_tiles = pl.cdiv(rows_padded, tile_rows)

    # Partition the tile range across the parallel grid axis (2 TCs on v7x).
    P = max(1, min(num_partitions, total_tiles))
    tiles_per_part = pl.cdiv(total_tiles, P)
    P = pl.cdiv(total_tiles, tiles_per_part)
    overrun = P * tiles_per_part - total_tiles        # redundant, skipped steps
    last_tile_valid = n - (total_tiles - 1) * tile_rows * _LANES
    need_mask = last_tile_valid < tile_rows * _LANES

    if overrun:
        # Clamp so overrun steps re-read an in-bounds tile; kernel skips them.
        in_map = lambda p, i: (jnp.minimum(p * tiles_per_part + i, total_tiles - 1), 0)
    else:
        in_map = lambda p, i: (p * tiles_per_part + i, 0)

    kernel = functools.partial(
        _logcosh_kernel,
        tiles_per_part=tiles_per_part,
        total_tiles=total_tiles,
        tile_rows=tile_rows,
        last_tile_valid=last_tile_valid,
        need_mask=need_mask,
        overrun=overrun,
    )

    partials = pl.pallas_call(
        kernel,
        out_shape=jax.ShapeDtypeStruct((P * 8, _LANES), jnp.float32),
        grid_spec=pltpu.PrefetchScalarGridSpec(
            num_scalar_prefetch=0,
            grid=(P, tiles_per_part),
            in_specs=[
                pl.BlockSpec((tile_rows, _LANES), in_map),
                pl.BlockSpec((tile_rows, _LANES), in_map),
            ],
            out_specs=pl.BlockSpec((8, _LANES), lambda p, i: (p, 0)),
        ),
        compiler_params=pltpu.CompilerParams(
            dimension_semantics=("parallel", "arbitrary"),
        ),
        cost_estimate=pl.CostEstimate(
            flops=8 * n,
            transcendentals=2 * n,
            bytes_accessed=2 * n * itemsize + P * 8 * _LANES * 4,
        ),
    )(yt, yp)

    # Tiny (P*8, 128) partial-sum slab: final reduce + mean in plain JAX.
    return jnp.sum(partials) * jnp.float32(1.0 / n)


def _reference(y_t, y_prime_t):
    d = y_t.astype(jnp.float32) - y_prime_t.astype(jnp.float32)
    return jnp.mean(jnp.log(jnp.cosh(d + 1e-12)))


if __name__ == "__main__":
    key = jax.random.PRNGKey(0)
    k1, k2, k3, k4 = jax.random.split(key, 4)

    # 1) Module-shaped example: LogCoshLoss(y_t, y_prime_t) on 4-D f32 tensors.
    #    n = 2048 -> pad-free fast path, single tile, single partition.
    y_t = jax.random.normal(k1, (2, 4, 16, 16), dtype=jnp.float32)
    y_p = jax.random.normal(k2, (2, 4, 16, 16), dtype=jnp.float32)
    loss = jax.block_until_ready(logcosh_loss(y_t, y_p))
    ref = _reference(y_t, y_p)
    assert loss.shape == ()
    assert jnp.allclose(loss, ref, atol=1e-5, rtol=1e-5), (loss, ref)

    # 2) Odd size + tiny tiles: exercises the tail mask, multi-tile reduction
    #    carry, both partitions and the clamped overrun step.
    a = jax.random.normal(k3, (3, 1000), dtype=jnp.float32)
    b = jax.random.normal(k4, (3, 1000), dtype=jnp.float32)
    loss2 = jax.block_until_ready(
        logcosh_loss(a, b, max_tile_rows=8, num_partitions=2))
    ref2 = _reference(a, b)
    assert jnp.allclose(loss2, ref2, atol=1e-5, rtol=1e-5), (loss2, ref2)

    # 3) Native bf16 inputs stay bf16 in HBM (half the bytes); cast in-kernel.
    y_t16 = y_t.astype(jnp.bfloat16)
    y_p16 = y_p.astype(jnp.bfloat16)
    loss3 = jax.block_until_ready(logcosh_loss(y_t16, y_p16))
    ref3 = _reference(y_t16, y_p16)
    assert jnp.allclose(loss3, ref3, atol=1e-5, rtol=1e-5), (loss3, ref3)

    print("KERNEL_OK")
</pallas_src>

<mosaic_0001>
module attributes {stable_mosaic.version = 11 : i64} {
  func.func @_logcosh_kernel(%arg0: i32, %arg1: i32, %arg2: memref<16x128xf32, #tpu.memory_space<vmem>>, %arg3: memref<16x128xf32, #tpu.memory_space<vmem>>, %arg4: memref<8x128xf32, #tpu.memory_space<vmem>>) attributes {dimension_semantics = [#tpu.dimension_semantics<parallel>, #tpu.dimension_semantics<arbitrary>], iteration_bounds = array<i64: 1, 1>, scalar_prefetch = 0 : i64, scratch_operands = 0 : i64, tpu.core_type = #tpu.core_type<tc>, window_params = [{transform_indices = @transform_0, window_bounds = array<i64: 16, 128>}, {transform_indices = @transform_1, window_bounds = array<i64: 16, 128>}, {transform_indices = @transform_2, window_bounds = array<i64: 8, 128>}]} {
    %c0_i32 = arith.constant 0 : i32
    %0 = arith.cmpi eq, %arg1, %c0_i32 : i32
    %1 = arith.extui %0 : i1 to i32
    %c0_i32_0 = arith.constant 0 : i32
    %2 = arith.cmpi ne, %1, %c0_i32_0 : i32
    scf.if %2 {
      %cst_11 = arith.constant 0.000000e+00 : f32
      %21 = vector.broadcast %cst_11 : f32 to vector<8x128xf32>
      %c0_12 = arith.constant 0 : index
      %c0_13 = arith.constant 0 : index
      %22 = vector.load %arg4[%c0_12, %c0_13] : memref<8x128xf32, #tpu.memory_space<vmem>>, vector<8x128xf32>
      tpu.vector_store %arg4[%c0_12, %c0_13], %21 {strides = array<i32>} : memref<8x128xf32, #tpu.memory_space<vmem>>, vector<8x128xf32>,
    } else {
    }
    %c0 = arith.constant 0 : index
    %c0_1 = arith.constant 0 : index
    %3 = vector.load %arg2[%c0, %c0_1] : memref<16x128xf32, #tpu.memory_space<vmem>>, vector<16x128xf32>
    %c0_2 = arith.constant 0 : index
    %c0_3 = arith.constant 0 : index
    %4 = vector.load %arg3[%c0_2, %c0_3] : memref<16x128xf32, #tpu.memory_space<vmem>>, vector<16x128xf32>
    %5 = arith.subf %3, %4 : vector<16x128xf32>
    %cst = arith.constant 9.99999996E-13 : f32
    %6 = vector.broadcast %cst : f32 to vector<16x128xf32>
    %7 = arith.addf %5, %6 : vector<16x128xf32>
    %8 = math.absf %7 : vector<16x128xf32>
    %cst_4 = arith.constant -2.000000e+00 : f32
    %9 = vector.broadcast %cst_4 : f32 to vector<16x128xf32>
    %10 = arith.mulf %9, %8 : vector<16x128xf32>
    %11 = math.exp %10 : vector<16x128xf32>
    %12 = math.log1p %11 : vector<16x128xf32>
    %13 = arith.addf %8, %12 : vector<16x128xf32>
    %cst_5 = arith.constant 0.693147182 : f32
    %14 = vector.broadcast %cst_5 : f32 to vector<16x128xf32>
    %15 = arith.subf %13, %14 : vector<16x128xf32>
    %c0_6 = arith.constant 0 : index
    %c0_7 = arith.constant 0 : index
    %16 = vector.load %arg4[%c0_6, %c0_7] : memref<8x128xf32, #tpu.memory_space<vmem>>, vector<8x128xf32>
    %17 = vector.shape_cast %15 : vector<16x128xf32> to vector<2x8x128xf32>
    %cst_8 = arith.constant dense<0.000000e+00> : vector<8x128xf32>
    %18 = vector.multi_reduction <add>, %17, %cst_8 [0] : vector<2x8x128xf32> to vector<8x128xf32>
    %19 = arith.addf %16, %18 : vector<8x128xf32>
    %c0_9 = arith.constant 0 : index
    %c0_10 = arith.constant 0 : index
    %20 = vector.load %arg4[%c0_9, %c0_10] : memref<8x128xf32, #tpu.memory_space<vmem>>, vector<8x128xf32>
    tpu.vector_store %arg4[%c0_9, %c0_10], %19 {strides = array<i32>} : memref<8x128xf32, #tpu.memory_space<vmem>>, vector<8x128xf32>,
    return
  }
  func.func @transform_0(%arg0: i32, %arg1: i32) -> (i32, i32) {
    %c1_i32 = arith.constant 1 : i32
    %0 = arith.muli %arg0, %c1_i32 : i32
    %1 = arith.addi %0, %arg1 : i32
    %c0_i32 = arith.constant 0 : i32
    %c0_i32_0 = arith.constant 0 : i32
    return %1, %c0_i32 : i32, i32
  }
  func.func @transform_1(%arg0: i32, %arg1: i32) -> (i32, i32) {
    %c1_i32 = arith.constant 1 : i32
    %0 = arith.muli %arg0, %c1_i32 : i32
    %1 = arith.addi %0, %arg1 : i32
    %c0_i32 = arith.constant 0 : i32
    %c0_i32_0 = arith.constant 0 : i32
    return %1, %c0_i32 : i32, i32
  }
  func.func @transform_2(%arg0: i32, %arg1: i32) -> (i32, i32) {
    %c0_i32 = arith.constant 0 : i32
    %c0_i32_0 = arith.constant 0 : i32
    return %arg0, %c0_i32 : i32, i32
  }
}

</mosaic_0001>

<llo_original>
// kernel: tpu_custom_call.1
$region0: #{tpu_custom_call.1}
  #allocation0 [shape = 'u32[]', space=smem, size = 0x4, offset = 0x4, fixed_abs, tag = 'smem constant byte address 0x4 - core index']
  #allocation1 [shape = 'u32[144,128]{1,0:T(1,128)}', space=vmem, size = 0x12000, scoped, tag = 'internal scratch']
  %s0 = inlined_call_operand.hbm [shape: f32[16,128], index: 0, kind: input, shape index: {}]
  %s1 = inlined_call_operand.hbm [shape: f32[16,128], index: 1, kind: input, shape index: {}]
  %s2 = inlined_call_operand.hbm [shape: f32[8,128], index: 2, kind: output, shape index: {}]
  %s3 = sld [smem:[#allocation0]]
  $region30: #{tpu_custom_call.1} parent=0
    _
  %s5 = ssub.s32 1, %s3
  %s6 = scalar_select 0, %s5, %s3
  $region1: #{tpu_custom_call.1} parent=0
    #allocation2 [shape = 'u8[8192]{0}', space=vmem, size = 0x2000, scoped, tag = 'input window, operand 0, single buffered']
    #allocation3 [shape = 's32[1]{0}', space=sflag, size = 0x4, scoped, tag = 'scoped memory for tpu_custom_call.1']
    #allocation4 [shape = 's32[1]{0}', space=sflag, size = 0x4, scoped, tag = 'scoped memory for tpu_custom_call.1']
    #allocation5 [shape = 'u8[8192]{0}', space=vmem, size = 0x2000, scoped, tag = 'input window, operand 1, single buffered']
    #allocation6 [shape = 's32[1]{0}', space=sflag, size = 0x4, scoped, tag = 'scoped memory for tpu_custom_call.1']
    #allocation7 [shape = 'u8[4096]{0}', space=vmem, size = 0x1000, scoped, tag = 'output window, operand 0, single buffered']
    %7 = vsyncpa [#allocation3], 0
    %8 = vsyncpa [#allocation6], 0
    %9 = vsyncpa [#allocation4], 0
    // Predicated region
    $region2: #{tpu_custom_call.1} parent=1 // pred_check
      _
    $region3: #{tpu_custom_call.1} parent=1 // pred_check_branch
      %11 = sbr.rel (0) target = $region5
    $region4: #{tpu_custom_call.1} parent=1 // pred_region
      %s12 = sadd.s32 0, 0
      %s13 = smul.u32 2, %s12
      %s15 = ssub.s32 256, 256
      %16 = vsyncadd [#allocation3], %s15
      %s17 = smul.addr %s13, 128
      %s18 = scalar_lea.hbm %s0, %s17
      %s19 = sshll.u32 [#allocation2], 4
      %s20 = int_to_ptr.vmem [resolvable:$true] %s19
      %25 = dma.hbm_to_vmem [thread:$0]  %s18, 256, %s20, [#allocation3], 128, 128, 8
    $region5: #{tpu_custom_call.1} parent=1 // pred_fallthru
      _
    // Predicated region
    $region6: #{tpu_custom_call.1} parent=1 // pred_check
      _
    $region7: #{tpu_custom_call.1} parent=1 // pred_check_branch
      %27 = sbr.rel (0) target = $region9
    $region8: #{tpu_custom_call.1} parent=1 // pred_region
      %s28 = sadd.s32 0, 0
      %s29 = smul.u32 2, %s28
      %s31 = ssub.s32 256, 256
      %32 = vsyncadd [#allocation6], %s31
      %s33 = smul.addr %s29, 128
      %s34 = scalar_lea.hbm %s1, %s33
      %s35 = sshll.u32 [#allocation5], 4
      %s36 = int_to_ptr.vmem [resolvable:$true] %s35
      %41 = dma.hbm_to_vmem [thread:$0]  %s34, 256, %s36, [#allocation6], 128, 128, 8
    $region9: #{tpu_custom_call.1} parent=1 // pred_fallthru
      _
    // Predicated region
    $region10: #{tpu_custom_call.1} parent=1 // pred_check
      _
    $region11: #{tpu_custom_call.1} parent=1 // pred_check_branch
      %43 = sbr.rel (0) target = $region13
    $region12: #{tpu_custom_call.1} parent=1 // pred_region
      %44 = dma.done [#allocation3], 256
    $region13: #{tpu_custom_call.1} parent=1 // pred_fallthru
      _
    // Predicated region
    $region14: #{tpu_custom_call.1} parent=1 // pred_check
      _
    $region15: #{tpu_custom_call.1} parent=1 // pred_check_branch
      %46 = sbr.rel (0) target = $region17
    $region16: #{tpu_custom_call.1} parent=1 // pred_region
      %47 = dma.done [#allocation6], 256
    $region17: #{tpu_custom_call.1} parent=1 // pred_fallthru
      _
    %s48 = sadd.s32 0, 0
    %s49 = smul.u32 2, %s48
    %s50 = sadd.s32 0, 0
    %s51 = smul.u32 2, %s50
    %p52 = scmp.eq.s32.totalorder 0, 0
    // Predicated region
    $region18: #{tpu_custom_call.1} parent=1 // pred_check
      %p53 = pneg %p52
    $region19: #{tpu_custom_call.1} parent=1 // pred_check_branch
      %55 = sbr.rel (%p53) target = $region21
    $region20: #{tpu_custom_call.1} parent=1 // pred_region
      %56 = vst [vmem:[#allocation7] sm:$0xff] 0.0
    $region21: #{tpu_custom_call.1} parent=1 // pred_fallthru
      _
    %v57 = vld [vmem:[#allocation2] sm:$0xff]
    %v58 = vld [vmem:[#allocation2 + $0x8] sm:$0xff]
    %v59 = vld [vmem:[#allocation5] sm:$0xff]
    %v60 = vld [vmem:[#allocation5 + $0x8] sm:$0xff]
    %v61 = vsub.f32 %v57, %v59
    %v62 = vsub.f32 %v58, %v60
    %v63 = vadd.f32 %v61, 1e-12
    %v64 = vadd.f32 %v62, 1e-12
    %v65 = vand.u32 2147483647, %v63
    %v66 = vand.u32 2147483647, %v64
    %v67 = vmul.f32 %v65, -2.0
    %v68 = vmul.f32 %v66, -2.0
    %v69 = vmul.f32 %v67, 1.442695
    %v70 = vpow.pop %v69
    %v71 = vmul.f32 %v68, 1.442695
    %v72 = vpow.pop %v71
    %v73 = vadd.f32 %v70, 1.0
    %v74 = vlog2.pop %v73
    %v75 = vmul.f32 %v74, 0.6931472
    %v76 = vmul.f32 -0.5, %v70
    %v77 = vadd.f32 %v76, 1.0
    %v78 = vmul.f32 %v77, %v70
    %v79 = vand.u32 2147483647, %v70
    %vm80 = vcmp.lt.f32.partialorder %v79, 0.0004427343
    %v81 = vsel %vm80, %v78, %v75
    %v82 = vadd.f32 %v72, 1.0
    %v83 = vlog2.pop %v82
    %v84 = vmul.f32 %v83, 0.6931472
    %v85 = vmul.f32 -0.5, %v72
    %v86 = vadd.f32 %v85, 1.0
    %v87 = vmul.f32 %v86, %v72
    %v88 = vand.u32 2147483647, %v72
    %vm89 = vcmp.lt.f32.partialorder %v88, 0.0004427343
    %v90 = vsel %vm89, %v87, %v84
    %v91 = vadd.f32 %v65, %v81
    %v92 = vadd.f32 %v66, %v90
    %v93 = vsub.f32 %v91, 0.6931472
    %v94 = vsub.f32 %v92, 0.6931472
    %v95 = vld [vmem:[#allocation7] sm:$0xff]
    %v96 = vadd.f32 %v93, %v94
    %v97 = vadd.f32 %v95, %v96
    %98 = vst [vmem:[#allocation7] sm:$0xff] %v97
    // Predicated region
    $region22: #{tpu_custom_call.1} parent=1 // pred_check
      _
    $region23: #{tpu_custom_call.1} parent=1 // pred_check_branch
      %100 = sbr.rel (0) target = $region25
    $region24: #{tpu_custom_call.1} parent=1 // pred_region
      %s102 = ssub.s32 128, 128
      %103 = vsyncadd [#allocation4], %s102
      %s105 = sshll.u32 [#allocation7], 4
      %s106 = int_to_ptr.vmem [resolvable:$true] %s105
      %108 = dma.vmem_to_hbm [thread:$0]  %s106, 128, %s2, [#allocation4]
    $region25: #{tpu_custom_call.1} parent=1 // pred_fallthru
      _
    // Predicated region
    $region26: #{tpu_custom_call.1} parent=1 // pred_check
      _
    $region27: #{tpu_custom_call.1} parent=1 // pred_check_branch
      %110 = sbr.rel (0) target = $region29
    $region28: #{tpu_custom_call.1} parent=1 // pred_region
      %111 = dma.done [#allocation4], 128
    $region29: #{tpu_custom_call.1} parent=1 // pred_fallthru
      _
    %112 = vsyncpa [#allocation3], 1
    %113 = vsyncpa [#allocation6], 1
    %114 = vsyncpa [#allocation4], 1

</llo_original>
